<compile_context>
chip_gen: v6e
topology: v6e:2x2x1
jax: 0.10.0
libtpu: 0.0.40
codegen_flags: <defaults>
</compile_context>

<pallas_src>
import functools
import math

import jax
import jax.numpy as jnp
from jax.experimental import pallas as pl
from jax.experimental.pallas import tpu as pltpu


def _round_up(a, b):
    return ((a + b - 1) // b) * b


def _arcface_epilogue(acc, x_ssq, w_ssq, tgt, col_offset, *, s, cos_m, sin_m,
                      threshold, mm0, out_dtype):
    """Normalization + ArcFace margin math. acc: (tm, tn) f32 raw dot."""
    # F.normalize(p=2, eps=1e-12) semantics: denom = max(||v||, 1e-12).
    inv_xn = jax.lax.rsqrt(jnp.maximum(x_ssq, 1e-24))   # (tm, 1)
    inv_wn = jax.lax.rsqrt(jnp.maximum(w_ssq, 1e-24))   # (1, tn)
    cos_theta = acc * inv_xn * inv_wn

    tm, tn = cos_theta.shape
    # One-hot target mask from a class-index iota (no scatter needed).
    col_ids = jax.lax.broadcasted_iota(jnp.int32, (tm, tn), 1) + col_offset
    is_target = col_ids == tgt                           # tgt: (tm, 1) int32

    # Clamp 1 - cos^2 at 0 to avoid NaN from rounding when |cos| ~ 1.
    sin_theta = jnp.sqrt(jnp.maximum(1.0 - cos_theta * cos_theta, 0.0))
    cos_m_theta = cos_theta * cos_m - sin_theta * sin_m
    # torch: relu(cos - threshold) == 0  <=>  cos <= threshold -> keep_val.
    margin = jnp.where(cos_theta > threshold, cos_m_theta, cos_theta - mm0)
    return (s * jnp.where(is_target, margin, cos_theta)).astype(out_dtype)


def arcface_kernel_1k(tgt_ref, x_ref, w_ref, o_ref, *, s, cos_m, sin_m,
                      threshold, mm0, tn):
    """Fast path: all of K fits in one tile. No scratch, no pl.when."""
    j = pl.program_id(1)              # top-level only (interpret/lowering safe)

    x = x_ref[...]                    # (tm, tk) compute dtype
    w = w_ref[...]                    # (tk, tn) compute dtype
    acc = jnp.dot(x, w, preferred_element_type=jnp.float32)

    xf = x.astype(jnp.float32)
    wf = w.astype(jnp.float32)
    x_ssq = jnp.sum(xf * xf, axis=1, keepdims=True)      # (tm, 1)
    w_ssq = jnp.sum(wf * wf, axis=0, keepdims=True)      # (1, tn)

    o_ref[...] = _arcface_epilogue(
        acc, x_ssq, w_ssq, tgt_ref[...], j * tn,
        s=s, cos_m=cos_m, sin_m=sin_m, threshold=threshold, mm0=mm0,
        out_dtype=o_ref.dtype)


def arcface_kernel_mk(tgt_ref, x_ref, w_ref, o_ref, xsq_ref, wsq_ref, *,
                      s, cos_m, sin_m, threshold, mm0, tn, nk):
    """K tiled over the innermost ("arbitrary") grid axis.

    The f32 output block itself is the matmul accumulator (its BlockSpec
    returns the same (i, j) block for every k), so no (tm, tn) VMEM scratch
    is needed — only tiny (tm,1)/(1,tn) sum-of-squares scratches.
    """
    # Hoist every program_id read out of the pl.when bodies.
    j = pl.program_id(1)
    k = pl.program_id(2)

    x = x_ref[...]
    w = w_ref[...]
    part = jnp.dot(x, w, preferred_element_type=jnp.float32)
    xf = x.astype(jnp.float32)
    wf = w.astype(jnp.float32)
    xsq_part = jnp.sum(xf * xf, axis=1, keepdims=True)
    wsq_part = jnp.sum(wf * wf, axis=0, keepdims=True)

    @pl.when(k == 0)
    def _():
        o_ref[...] = part
        xsq_ref[...] = xsq_part
        wsq_ref[...] = wsq_part

    @pl.when(k > 0)
    def _():
        o_ref[...] += part
        xsq_ref[...] += xsq_part
        wsq_ref[...] += wsq_part

    @pl.when(k == nk - 1)
    def _():
        o_ref[...] = _arcface_epilogue(
            o_ref[...], xsq_ref[...], wsq_ref[...], tgt_ref[...], j * tn,
            s=s, cos_m=cos_m, sin_m=sin_m, threshold=threshold, mm0=mm0,
            out_dtype=o_ref.dtype)


def arcface_forward(x, weight, target, *, s=30.0, m=0.5,
                    tm=512, tn=1024, tk=512,
                    compute_dtype=jnp.bfloat16, out_dtype=jnp.float32):
    """ArcFace forward: x (B, K), weight (K, N), target (B,) -> (B, N)."""
    B, K = x.shape
    K2, N = weight.shape
    assert K == K2

    cos_m = math.cos(m)
    sin_m = math.sin(m)
    threshold = math.cos(math.pi - m)
    mm0 = sin_m * m

    # bf16 matmul operands need a 16-row sublane multiple; f32 needs 8.
    sub = 16 if compute_dtype == jnp.bfloat16 else 8
    tm = min(tm, _round_up(B, sub))
    tn = min(tn, _round_up(N, 128))   # lane-dense output (multiple of 128)
    tk = min(tk, _round_up(K, 128))
    Bp, Np, Kp = _round_up(B, tm), _round_up(N, tn), _round_up(K, tk)
    nk = Kp // tk

    # Cast/pad only when actually needed: an already-bf16, tile-aligned weight
    # (keep a persistent copy in the training loop) costs no extra HBM pass.
    def prep(a, pad_rows, pad_cols, dtype):
        if a.dtype != dtype:
            a = a.astype(dtype)
        if pad_rows or pad_cols:
            a = jnp.pad(a, ((0, pad_rows), (0, pad_cols)))
        return a

    x_p = prep(x, Bp - B, Kp - K, compute_dtype)
    w_p = prep(weight, Kp - K, Np - N, compute_dtype)
    tgt_p = prep(target.reshape(-1, 1), Bp - B, 0, jnp.int32)

    consts = dict(s=float(s), cos_m=cos_m, sin_m=sin_m,
                  threshold=threshold, mm0=mm0, tn=tn)

    if nk == 1:
        kernel = functools.partial(arcface_kernel_1k, **consts)
        grid = (Bp // tm, Np // tn)
        in_specs = [
            pl.BlockSpec((tm, 1), lambda i, j: (i, 0)),    # target column
            pl.BlockSpec((tm, tk), lambda i, j: (i, 0)),   # x tile
            pl.BlockSpec((tk, tn), lambda i, j: (0, j)),   # weight tile
        ]
        out_specs = pl.BlockSpec((tm, tn), lambda i, j: (i, j))
        scratch = []
        semantics = ("parallel", "parallel")
        kernel_out_dtype = out_dtype
    else:
        kernel = functools.partial(arcface_kernel_mk, nk=nk, **consts)
        grid = (Bp // tm, Np // tn, nk)
        in_specs = [
            pl.BlockSpec((tm, 1), lambda i, j, k: (i, 0)),
            pl.BlockSpec((tm, tk), lambda i, j, k: (i, k)),
            pl.BlockSpec((tk, tn), lambda i, j, k: (k, j)),
        ]
        out_specs = pl.BlockSpec((tm, tn), lambda i, j, k: (i, j))
        scratch = [pltpu.VMEM((tm, 1), jnp.float32),
                   pltpu.VMEM((1, tn), jnp.float32)]
        semantics = ("parallel", "parallel", "arbitrary")
        # Output block doubles as the f32 accumulator across k.
        kernel_out_dtype = jnp.float32

    out = pl.pallas_call(
        kernel,
        out_shape=jax.ShapeDtypeStruct((Bp, Np), kernel_out_dtype),
        grid_spec=pltpu.PrefetchScalarGridSpec(
            num_scalar_prefetch=0,
            grid=grid,
            in_specs=in_specs,
            out_specs=out_specs,
            scratch_shapes=scratch,
        ),
        compiler_params=pltpu.CompilerParams(dimension_semantics=semantics),
    )(tgt_p, x_p, w_p)

    out = out[:B, :N]
    if out.dtype != out_dtype:
        out = out.astype(out_dtype)
    return out


def arcface_reference(x, weight, target, *, s=30.0, m=0.5):
    """Pure-JAX f32 reference mirroring the PyTorch forward."""
    cos_m = math.cos(m)
    sin_m = math.sin(m)
    threshold = math.cos(math.pi - m)
    mm0 = sin_m * m
    xn = x / jnp.maximum(jnp.linalg.norm(x, axis=1, keepdims=True), 1e-12)
    wn = weight / jnp.maximum(jnp.linalg.norm(weight, axis=0, keepdims=True), 1e-12)
    cos_theta = xn @ wn
    index = jax.nn.one_hot(target, weight.shape[1], dtype=jnp.float32)
    sin_theta = jnp.sqrt(jnp.maximum(1.0 - cos_theta ** 2, 0.0))
    cos_m_theta = cos_theta * cos_m - sin_theta * sin_m
    replace = (jnp.maximum(cos_theta - threshold, 0.0) == 0.0).astype(jnp.float32)
    keep_val = cos_theta - mm0
    cos_m_theta = keep_val * replace + cos_m_theta * (1.0 - replace)
    return s * (cos_theta * (1.0 - index) + cos_m_theta * index)


if __name__ == "__main__":
    B, in_features, out_features = 8, 128, 256

    key = jax.random.PRNGKey(0)
    k_x, k_w, k_t = jax.random.split(key, 3)

    x = jax.random.normal(k_x, (B, in_features), dtype=jnp.float32)
    target = jax.random.randint(k_t, (B,), 0, out_features, dtype=jnp.int32)
    xavier_std = math.sqrt(2.0 / (in_features + out_features))
    weight = xavier_std * jax.random.normal(
        k_w, (in_features, out_features), dtype=jnp.float32)

    ref = arcface_reference(x, weight, target, s=30.0, m=0.5)

    # 1) Exact-math path (f32 MXU operands), single-K-tile kernel.
    out_f32 = jax.block_until_ready(
        arcface_forward(x, weight, target, s=30.0, m=0.5,
                        compute_dtype=jnp.float32))
    assert out_f32.shape == (B, out_features)
    assert jnp.allclose(out_f32, ref, atol=1e-3, rtol=1e-4), "f32 single-K mismatch"

    # 2) Multi-K-tile path (K split over the reduction grid axis).
    K2 = 256
    k_x2, k_w2 = jax.random.split(jax.random.PRNGKey(1), 2)
    x2 = jax.random.normal(k_x2, (B, K2), dtype=jnp.float32)
    w2 = jax.random.normal(k_w2, (K2, out_features), dtype=jnp.float32) * 0.05
    ref2 = arcface_reference(x2, w2, target, s=30.0, m=0.5)
    out_mk = jax.block_until_ready(
        arcface_forward(x2, w2, target, s=30.0, m=0.5,
                        compute_dtype=jnp.float32, tk=128))
    assert out_mk.shape == (B, out_features)
    assert jnp.allclose(out_mk, ref2, atol=1e-3, rtol=1e-4), "f32 multi-K mismatch"

    # 3) Optimized bf16-operand path, compared against a reference fed the
    #    same bf16-quantized inputs (isolates kernel logic from quantization).
    xq = x.astype(jnp.bfloat16).astype(jnp.float32)
    wq = weight.astype(jnp.bfloat16).astype(jnp.float32)
    ref_q = arcface_reference(xq, wq, target, s=30.0, m=0.5)
    out_bf16 = jax.block_until_ready(
        arcface_forward(x, weight, target, s=30.0, m=0.5,
                        compute_dtype=jnp.bfloat16))
    assert out_bf16.shape == (B, out_features)
    assert jnp.allclose(out_bf16, ref_q, atol=2e-2, rtol=1e-2), "bf16 mismatch"
    # Loose sanity check against the full-precision reference too.
    assert jnp.allclose(out_bf16, ref, atol=0.35, rtol=0.05), "bf16 drift too large"

    # 4) bf16 output option (halves output writeback traffic).
    out_bo = jax.block_until_ready(
        arcface_forward(x, weight, target, s=30.0, m=0.5,
                        compute_dtype=jnp.bfloat16, out_dtype=jnp.bfloat16))
    assert out_bo.dtype == jnp.bfloat16 and out_bo.shape == (B, out_features)
    assert jnp.allclose(out_bo.astype(jnp.float32), ref_q, atol=0.3, rtol=0.05)

    print("KERNEL_OK")
</pallas_src>

<mosaic_0001>
module attributes {stable_mosaic.version = 11 : i64} {
  func.func @arcface_kernel_1k(%arg0: i32, %arg1: i32, %arg2: memref<8x1xi32, #tpu.memory_space<vmem>>, %arg3: memref<8x128xf32, #tpu.memory_space<vmem>>, %arg4: memref<128x256xf32, #tpu.memory_space<vmem>>, %arg5: memref<8x256xf32, #tpu.memory_space<vmem>>) attributes {dimension_semantics = [#tpu.dimension_semantics<parallel>, #tpu.dimension_semantics<parallel>], iteration_bounds = array<i64: 1, 1>, scalar_prefetch = 0 : i64, scratch_operands = 0 : i64, tpu.core_type = #tpu.core_type<tc>, window_params = [{transform_indices = @transform_0, window_bounds = array<i64: 8, 1>}, {transform_indices = @transform_1, window_bounds = array<i64: 8, 128>}, {transform_indices = @transform_2, window_bounds = array<i64: 128, 256>}, {transform_indices = @transform_3, window_bounds = array<i64: 8, 256>}]} {
    %c0 = arith.constant 0 : index
    %c0_0 = arith.constant 0 : index
    %0 = vector.load %arg3[%c0, %c0_0] : memref<8x128xf32, #tpu.memory_space<vmem>>, vector<8x128xf32>
    %c0_1 = arith.constant 0 : index
    %c0_2 = arith.constant 0 : index
    %1 = vector.load %arg4[%c0_1, %c0_2] : memref<128x256xf32, #tpu.memory_space<vmem>>, vector<128x256xf32>
    %cst = arith.constant dense<0.000000e+00> : vector<8x256xf32>
    %2 = tpu.matmul %0, %1, %cst {dimension_numbers = #tpu.dot_dimension_numbers<[1], [0], [0], [1], [0, 0, 1, 1], [], []>} : vector<8x128xf32>, vector<128x256xf32>, vector<8x256xf32> -> vector<8x256xf32>
    %3 = arith.mulf %0, %0 : vector<8x128xf32>
    %cst_3 = arith.constant dense<0.000000e+00> : vector<8xf32>
    %4 = vector.multi_reduction <add>, %3, %cst_3 [1] : vector<8x128xf32> to vector<8xf32>
    %5 = vector.shape_cast %4 : vector<8xf32> to vector<8x1xf32>
    %6 = arith.mulf %1, %1 : vector<128x256xf32>
    %cst_4 = arith.constant dense<0.000000e+00> : vector<256xf32>
    %7 = vector.multi_reduction <add>, %6, %cst_4 [0] : vector<128x256xf32> to vector<256xf32>
    %8 = vector.shape_cast %7 : vector<256xf32> to vector<1x256xf32>
    %c0_5 = arith.constant 0 : index
    %c0_6 = arith.constant 0 : index
    %9 = vector.load %arg2[%c0_5, %c0_6] : memref<8x1xi32, #tpu.memory_space<vmem>>, vector<8x1xi32>
    %c256_i32 = arith.constant 256 : i32
    %10 = arith.muli %arg1, %c256_i32 : i32
    %cst_7 = arith.constant 1.000000e-24 : f32
    %11 = vector.broadcast %cst_7 : f32 to vector<8x1xf32>
    %12 = arith.maximumf %5, %11 : vector<8x1xf32>
    %13 = math.rsqrt %12 : vector<8x1xf32>
    %cst_8 = arith.constant 1.000000e-24 : f32
    %14 = vector.broadcast %cst_8 : f32 to vector<1x256xf32>
    %15 = arith.maximumf %8, %14 : vector<1x256xf32>
    %16 = math.rsqrt %15 : vector<1x256xf32>
    %17 = vector.broadcast %13 : vector<8x1xf32> to vector<8x256xf32>
    %18 = arith.mulf %2, %17 : vector<8x256xf32>
    %19 = vector.broadcast %16 : vector<1x256xf32> to vector<8x256xf32>
    %20 = arith.mulf %18, %19 : vector<8x256xf32>
    %21 = tpu.iota {dimensions = array<i32: 1>} : vector<8x256xi32>
    %22 = vector.broadcast %10 : i32 to vector<8x256xi32>
    %23 = arith.addi %21, %22 : vector<8x256xi32>
    %24 = vector.broadcast %9 : vector<8x1xi32> to vector<8x256xi32>
    %25 = arith.cmpi eq, %23, %24 : vector<8x256xi32>
    %26 = arith.mulf %20, %20 : vector<8x256xf32>
    %cst_9 = arith.constant 1.000000e+00 : f32
    %27 = vector.broadcast %cst_9 : f32 to vector<8x256xf32>
    %28 = arith.subf %27, %26 : vector<8x256xf32>
    %cst_10 = arith.constant 0.000000e+00 : f32
    %29 = vector.broadcast %cst_10 : f32 to vector<8x256xf32>
    %30 = arith.maximumf %28, %29 : vector<8x256xf32>
    %31 = math.sqrt %30 : vector<8x256xf32>
    %cst_11 = arith.constant 0.87758255 : f32
    %32 = vector.broadcast %cst_11 : f32 to vector<8x256xf32>
    %33 = arith.mulf %20, %32 : vector<8x256xf32>
    %cst_12 = arith.constant 0.47942555 : f32
    %34 = vector.broadcast %cst_12 : f32 to vector<8x256xf32>
    %35 = arith.mulf %31, %34 : vector<8x256xf32>
    %36 = arith.subf %33, %35 : vector<8x256xf32>
    %cst_13 = arith.constant -0.87758255 : f32
    %37 = vector.broadcast %cst_13 : f32 to vector<8x256xf32>
    %38 = arith.cmpf ogt, %20, %37 : vector<8x256xf32>
    %cst_14 = arith.constant 0.239712775 : f32
    %39 = vector.broadcast %cst_14 : f32 to vector<8x256xf32>
    %40 = arith.subf %20, %39 : vector<8x256xf32>
    %41 = arith.select %38, %36, %40 : vector<8x256xi1>, vector<8x256xf32>
    %42 = arith.select %25, %41, %20 : vector<8x256xi1>, vector<8x256xf32>
    %cst_15 = arith.constant 3.000000e+01 : f32
    %43 = vector.broadcast %cst_15 : f32 to vector<8x256xf32>
    %44 = arith.mulf %43, %42 : vector<8x256xf32>
    %c0_16 = arith.constant 0 : index
    %c0_17 = arith.constant 0 : index
    %45 = vector.load %arg5[%c0_16, %c0_17] : memref<8x256xf32, #tpu.memory_space<vmem>>, vector<8x256xf32>
    tpu.vector_store %arg5[%c0_16, %c0_17], %44 {strides = array<i32>} : memref<8x256xf32, #tpu.memory_space<vmem>>, vector<8x256xf32>,
    return
  }
  func.func @transform_0(%arg0: i32, %arg1: i32) -> (i32, i32) {
    %c0_i32 = arith.constant 0 : i32
    %c0_i32_0 = arith.constant 0 : i32
    return %arg0, %c0_i32 : i32, i32
  }
  func.func @transform_1(%arg0: i32, %arg1: i32) -> (i32, i32) {
    %c0_i32 = arith.constant 0 : i32
    %c0_i32_0 = arith.constant 0 : i32
    return %arg0, %c0_i32 : i32, i32
  }
  func.func @transform_2(%arg0: i32, %arg1: i32) -> (i32, i32) {
    %c0_i32 = arith.constant 0 : i32
    %c0_i32_0 = arith.constant 0 : i32
    return %c0_i32, %arg1 : i32, i32
  }
  func.func @transform_3(%arg0: i32, %arg1: i32) -> (i32, i32) {
    %c0_i32 = arith.constant 0 : i32
    return %arg0, %arg1 : i32, i32
  }
}

</mosaic_0001>

<llo_original>
// kernel: tpu_custom_call.1
$region0: #{tpu_custom_call.1}
  #allocation0 [shape = 'u32[]', space=smem, size = 0x4, offset = 0x4, fixed_abs, tag = 'smem constant byte address 0x4 - core index']
  #allocation1 [shape = 'u32[144,128]{1,0:T(1,128)}', space=vmem, size = 0x12000, scoped, tag = 'internal scratch']
  %s0 = inlined_call_operand.vmem [shape: s32[8,1], index: 0, kind: input, shape index: {}]
  %s1 = inlined_call_operand.vmem [shape: f32[8,128], index: 1, kind: input, shape index: {}]
  %s2 = inlined_call_operand.hbm [shape: f32[128,256], index: 2, kind: input, shape index: {}]
  %s3 = inlined_call_operand.hbm [shape: f32[8,256], index: 3, kind: output, shape index: {}]
  %s4 = sld [smem:[#allocation0]]
  $region26: #{tpu_custom_call.1} parent=0
    _
  %s6 = ssub.s32 1, %s4
  %s7 = scalar_select 0, %s6, %s4
  $region1: #{tpu_custom_call.1} parent=0
    #allocation2 [shape = 'u8[131072]{0}', space=vmem, size = 0x20000, scoped, tag = 'input window, operand 2, single buffered']
    #allocation3 [shape = 's32[1]{0}', space=sflag, size = 0x4, scoped, tag = 'scoped memory for tpu_custom_call.1']
    #allocation4 [shape = 's32[1]{0}', space=sflag, size = 0x4, scoped, tag = 'scoped memory for tpu_custom_call.1']
    #allocation5 [shape = 'u8[8192]{0}', space=vmem, size = 0x2000, scoped, tag = 'output window, operand 0, single buffered']
    %8 = vsyncpa [#allocation3], 0
    %9 = vsyncpa [#allocation4], 0
    // Predicated region
    $region2: #{tpu_custom_call.1} parent=1 // pred_check
      _
    $region3: #{tpu_custom_call.1} parent=1 // pred_check_branch
      %11 = sbr.rel (0) target = $region5
    $region4: #{tpu_custom_call.1} parent=1 // pred_region
      _
    $region5: #{tpu_custom_call.1} parent=1 // pred_fallthru
      _
    // Predicated region
    $region6: #{tpu_custom_call.1} parent=1 // pred_check
      _
    $region7: #{tpu_custom_call.1} parent=1 // pred_check_branch
      %13 = sbr.rel (0) target = $region9
    $region8: #{tpu_custom_call.1} parent=1 // pred_region
      _
    $region9: #{tpu_custom_call.1} parent=1 // pred_fallthru
      _
    // Predicated region
    $region10: #{tpu_custom_call.1} parent=1 // pred_check
      _
    $region11: #{tpu_custom_call.1} parent=1 // pred_check_branch
      %15 = sbr.rel (0) target = $region13
    $region12: #{tpu_custom_call.1} parent=1 // pred_region
      %s17 = ssub.s32 4096, 4096
      %18 = vsyncadd [#allocation3], %s17
      %s19 = sshll.u32 [#allocation2], 4
      %s20 = int_to_ptr.vmem [resolvable:$true] %s19
      %25 = dma.hbm_to_vmem [thread:$0]  %s2, 4096, %s20, [#allocation3], 256, 256, 16
    $region13: #{tpu_custom_call.1} parent=1 // pred_fallthru
      _
    // Predicated region
    $region14: #{tpu_custom_call.1} parent=1 // pred_check
      _
    $region15: #{tpu_custom_call.1} parent=1 // pred_check_branch
      %27 = sbr.rel (0) target = $region17
    $region16: #{tpu_custom_call.1} parent=1 // pred_region
      %28 = dma.done [#allocation3], 4096
    $region17: #{tpu_custom_call.1} parent=1 // pred_fallthru
      _
    %v29 = vld [vmem:[%s1] sm:$0xff]
    %v30 = vld [vmem:[#allocation2] sm:$0xff]
    %v31 = vld [vmem:[#allocation2 + $0x8] sm:$0xff]
    %v32 = vld [vmem:[#allocation2 + $0x10] sm:$0xff]
    %v33 = vld [vmem:[#allocation2 + $0x18] sm:$0xff]
    %v34 = vld [vmem:[#allocation2 + $0x20] sm:$0xff]
    %v35 = vld [vmem:[#allocation2 + $0x28] sm:$0xff]
    %v36 = vld [vmem:[#allocation2 + $0x30] sm:$0xff]
    %v37 = vld [vmem:[#allocation2 + $0x38] sm:$0xff]
    %v38 = vld [vmem:[#allocation2 + $0x40] sm:$0xff]
    %v39 = vld [vmem:[#allocation2 + $0x48] sm:$0xff]
    %v40 = vld [vmem:[#allocation2 + $0x50] sm:$0xff]
    %v41 = vld [vmem:[#allocation2 + $0x58] sm:$0xff]
    %v42 = vld [vmem:[#allocation2 + $0x60] sm:$0xff]
    %v43 = vld [vmem:[#allocation2 + $0x68] sm:$0xff]
    %v44 = vld [vmem:[#allocation2 + $0x70] sm:$0xff]
    %v45 = vld [vmem:[#allocation2 + $0x78] sm:$0xff]
    %v46 = vld [vmem:[#allocation2 + $0x80] sm:$0xff]
    %v47 = vld [vmem:[#allocation2 + $0x88] sm:$0xff]
    %v48 = vld [vmem:[#allocation2 + $0x90] sm:$0xff]
    %v49 = vld [vmem:[#allocation2 + $0x98] sm:$0xff]
    %v50 = vld [vmem:[#allocation2 + $0xa0] sm:$0xff]
    %v51 = vld [vmem:[#allocation2 + $0xa8] sm:$0xff]
    %v52 = vld [vmem:[#allocation2 + $0xb0] sm:$0xff]
    %v53 = vld [vmem:[#allocation2 + $0xb8] sm:$0xff]
    %v54 = vld [vmem:[#allocation2 + $0xc0] sm:$0xff]
    %v55 = vld [vmem:[#allocation2 + $0xc8] sm:$0xff]
    %v56 = vld [vmem:[#allocation2 + $0xd0] sm:$0xff]
    %v57 = vld [vmem:[#allocation2 + $0xd8] sm:$0xff]
    %v58 = vld [vmem:[#allocation2 + $0xe0] sm:$0xff]
    %v59 = vld [vmem:[#allocation2 + $0xe8] sm:$0xff]
    %v60 = vld [vmem:[#allocation2 + $0xf0] sm:$0xff]
    %v61 = vld [vmem:[#allocation2 + $0xf8] sm:$0xff]
    %62 = vmatprep.subr.mxu0 %v61
    %63 = vmatpush1.msra.mxu0 %v60
    %64 = vmatprep.subr.mxu0 %v59
    %65 = vmatpush1.msra.mxu0 %v58
    %66 = vmatprep.subr.mxu0 %v57
    %67 = vmatpush1.msra.mxu0 %v56
    %68 = vmatprep.subr.mxu0 %v55
    %69 = vmatpush1.msra.mxu0 %v54
    %70 = vmatprep.subr.mxu0 %v53
    %71 = vmatpush1.msra.mxu0 %v52
    %72 = vmatprep.subr.mxu0 %v51
    %73 = vmatpush1.msra.mxu0 %v50
    %74 = vmatprep.subr.mxu0 %v49
    %75 = vmatpush1.msra.mxu0 %v48
    %76 = vmatprep.subr.mxu0 %v47
    %77 = vmatpush1.msra.mxu0 %v46
    %78 = vmatprep.subr.mxu0 %v45
    %79 = vmatpush1.msra.mxu0 %v44
    %80 = vmatprep.subr.mxu0 %v43
    %81 = vmatpush1.msra.mxu0 %v42
    %82 = vmatprep.subr.mxu0 %v41
    %83 = vmatpush1.msra.mxu0 %v40
    %84 = vmatprep.subr.mxu0 %v39
    %85 = vmatpush1.msra.mxu0 %v38
    %86 = vmatprep.subr.mxu0 %v37
    %87 = vmatpush1.msra.mxu0 %v36
    %88 = vmatprep.subr.mxu0 %v35
    %89 = vmatpush1.msra.mxu0 %v34
    %90 = vmatprep.subr.mxu0 %v33
    %91 = vmatpush1.msra.mxu0 %v32
    %92 = vmatprep.subr.mxu0 %v31
    %93 = vmatpush1.msra.mxu0 %v30
    %94 = vmatprep.subr.mxu0 0.0
    %95 = vmatpush2.msra.mxu0 0.0
    %96 = vmatprep.subr.mxu0 0.0
    %97 = vmatpush2.msra.mxu0 0.0
    %98 = vmatprep.subr.mxu0 0.0
    %99 = vmatpush2.msra.mxu0 0.0
    %100 = vmatprep.subr.mxu0 0.0
    %101 = vmatpush2.msra.mxu0 0.0
    %102 = vmatprep.subr.mxu0 0.0
    %103 = vmatpush2.msra.mxu0 0.0
    %104 = vmatprep.subr.mxu0 0.0
    %105 = vmatpush2.msra.mxu0 0.0
    %106 = vmatprep.subr.mxu0 0.0
    %107 = vmatpush2.msra.mxu0 0.0
    %108 = vmatprep.subr.mxu0 0.0
    %109 = vmatpush2.msra.mxu0 0.0
    %110 = vmatprep.subr.mxu0 0.0
    %111 = vmatpush2.msra.mxu0 0.0
    %112 = vmatprep.subr.mxu0 0.0
    %113 = vmatpush2.msra.mxu0 0.0
    %114 = vmatprep.subr.mxu0 0.0
    %115 = vmatpush2.msra.mxu0 0.0
    %116 = vmatprep.subr.mxu0 0.0
    %117 = vmatpush2.msra.mxu0 0.0
    %118 = vmatprep.subr.mxu0 0.0
    %119 = vmatpush2.msra.mxu0 0.0
    %120 = vmatprep.subr.mxu0 0.0
    %121 = vmatpush2.msra.mxu0 0.0
    %122 = vmatprep.subr.mxu0 0.0
    %123 = vmatpush2.msra.mxu0 0.0
    %124 = vmatprep.subr.mxu0 0.0
    %125 = vmatpush2.msra.mxu0 0.0
    %126 = vmatprep.mubr.f32.mxu0 0.0
    %127 = vmatmul.mubr.f32.gmra.mxu0 %v29
    %v128 = vpop.f32.mrf.mxu0
    %v129 = vadd.f32 0.0, %v128
    %v130 = vpop.f32.mrf.mxu0
    %v131 = vadd.f32 0.0, %v130
    %132 = vdwg.mxu0
    %v133 = vmul.f32 %v29, %v29
    %134 = vadd.xlane.f32.xlu0 %v133
    %v135 = vpop.xlane.xlu0 %134
    %v136 = vmul.f32 %v30, %v30
    %v137 = vmul.f32 %v31, %v31
    %v138 = vmul.f32 %v32, %v32
    %v139 = vmul.f32 %v33, %v33
    %v140 = vmul.f32 %v34, %v34
    %v141 = vmul.f32 %v35, %v35
    %v142 = vmul.f32 %v36, %v36
    %v143 = vmul.f32 %v37, %v37
    %v144 = vmul.f32 %v38, %v38
    %v145 = vmul.f32 %v39, %v39
    %v146 = vmul.f32 %v40, %v40
    %v147 = vmul.f32 %v41, %v41
    %v148 = vmul.f32 %v42, %v42
    %v149 = vmul.f32 %v43, %v43
    %v150 = vmul.f32 %v44, %v44
    %v151 = vmul.f32 %v45, %v45
    %v152 = vmul.f32 %v46, %v46
    %v153 = vmul.f32 %v47, %v47
    %v154 = vmul.f32 %v48, %v48
    %v155 = vmul.f32 %v49, %v49
    %v156 = vmul.f32 %v50, %v50
    %v157 = vmul.f32 %v51, %v51
    %v158 = vmul.f32 %v52, %v52
    %v159 = vmul.f32 %v53, %v53
    %v160 = vmul.f32 %v54, %v54
    %v161 = vmul.f32 %v55, %v55
    %v162 = vmul.f32 %v56, %v56
    %v163 = vmul.f32 %v57, %v57
    %v164 = vmul.f32 %v58, %v58
    %v165 = vmul.f32 %v59, %v59
    %v166 = vmul.f32 %v60, %v60
    %v167 = vmul.f32 %v61, %v61
    %v168 = vadd.f32 %v136, %v138
    %v169 = vadd.f32 %v168, %v140
    %v170 = vadd.f32 %v169, %v142
    %v171 = vadd.f32 %v170, %v144
    %v172 = vadd.f32 %v171, %v146
    %v173 = vadd.f32 %v172, %v148
    %v174 = vadd.f32 %v173, %v150
    %v175 = vadd.f32 %v174, %v152
    %v176 = vadd.f32 %v175, %v154
    %v177 = vadd.f32 %v176, %v156
    %v178 = vadd.f32 %v177, %v158
    %v179 = vadd.f32 %v178, %v160
    %v180 = vadd.f32 %v179, %v162
    %v181 = vadd.f32 %v180, %v164
    %v182 = vadd.f32 %v181, %v166
    %v183 = vrot.slane %v182, 4
    %v184 = vadd.f32 %v182, %v183
    %v185 = vrot.slane %v184, 2
    %v186 = vadd.f32 %v184, %v185
    %v187 = vrot.slane %v186, 1
    %v188 = vadd.f32 %v186, %v187
    %v189 = vadd.f32 %v137, %v139
    %v190 = vadd.f32 %v189, %v141
    %v191 = vadd.f32 %v190, %v143
    %v192 = vadd.f32 %v191, %v145
    %v193 = vadd.f32 %v192, %v147
    %v194 = vadd.f32 %v193, %v149
    %v195 = vadd.f32 %v194, %v151
    %v196 = vadd.f32 %v195, %v153
    %v197 = vadd.f32 %v196, %v155
    %v198 = vadd.f32 %v197, %v157
    %v199 = vadd.f32 %v198, %v159
    %v200 = vadd.f32 %v199, %v161
    %v201 = vadd.f32 %v200, %v163
    %v202 = vadd.f32 %v201, %v165
    %v203 = vadd.f32 %v202, %v167
    %v204 = vrot.slane %v203, 4
    %v205 = vadd.f32 %v203, %v204
    %v206 = vrot.slane %v205, 2
    %v207 = vadd.f32 %v205, %v206
    %v208 = vrot.slane %v207, 1
    %v209 = vadd.f32 %v207, %v208
    %v210 = vld [vmem:[%s0] sm:$0xff]
    %s211 = smul.u32 0, 256
    %v212 = vmax.f32 %v135, 1e-24
    %v213 = vrsqrt.pop %v212
    %v214 = vmax.f32 %v188, 1e-24
    %v215 = vmax.f32 %v209, 1e-24
    %v216 = vrsqrt.pop %v214
    %v217 = vrsqrt.pop %v215
    %v218 = vmul.f32 %v129, %v213
    %v219 = vmul.f32 %v131, %v213
    %v220 = vmul.f32 %v218, %v216
    %v221 = vmul.f32 %v219, %v217
    %v222 = vlaneseq
    %v223 = vand.u32 %v222, 127
    %v224 = vadd.s32 %v223, 128
    %v225 = vstv %s211
    %v226 = vadd.s32 %v223, %v225
    %v227 = vadd.s32 %v224, %v225
    %228 = vset.pattern.permute.xlu0 0
    %229 = vperm.xlu0 %228, %v210
    %v230 = vpop.permute.xlu0 %229
    %vm231 = vcmp.eq.s32.totalorder %v226, %v230
    %vm232 = vcmp.eq.s32.totalorder %v227, %v230
    %v233 = vmul.f32 %v220, %v220
    %v234 = vmul.f32 %v221, %v221
    %v235 = vsub.f32 1.0, %v233
    %v236 = vsub.f32 1.0, %v234
    %v237 = vmax.f32 %v235, 0.0
    %v238 = vmax.f32 %v236, 0.0
    %v239 = vrsqrt.pop %v237
    %v240 = vmul.f32 %v237, %v239
    %vm241 = vcmp.eq.f32.partialorder %v237, inf
    %v242 = vsel %vm241, %v237, %v240
    %vm243 = vcmp.eq.f32.partialorder %v237, 0.0
    %v244 = vand.u32 %v237, 2147483648
    %v245 = vsel %vm243, %v244, %v242
    %v246 = vrsqrt.pop %v238
    %v247 = vmul.f32 %v238, %v246
    %vm248 = vcmp.eq.f32.partialorder %v238, inf
    %v249 = vsel %vm248, %v238, %v247
    %vm250 = vcmp.eq.f32.partialorder %v238, 0.0
    %v251 = vand.u32 %v238, 2147483648
    %v252 = vsel %vm250, %v251, %v249
    %v253 = vmul.f32 %v220, 0.87758255
    %v254 = vmul.f32 %v221, 0.87758255
    %v255 = vmul.f32 %v245, 0.47942555
    %v256 = vmul.f32 %v252, 0.47942555
    %v257 = vsub.f32 %v253, %v255
    %v258 = vsub.f32 %v254, %v256
    %vm259 = vcmp.gt.f32.partialorder %v220, -0.87758255
    %vm260 = vcmp.gt.f32.partialorder %v221, -0.87758255
    %v261 = vsub.f32 %v220, 0.23971277
    %v262 = vsub.f32 %v221, 0.23971277
    %v263 = vsel %vm259, %v257, %v261
    %v264 = vsel %vm260, %v258, %v262
    %v265 = vsel %vm231, %v263, %v220
    %v266 = vsel %vm232, %v264, %v221
    %v267 = vmul.f32 %v265, 30.0
    %v268 = vmul.f32 %v266, 30.0
    %269 = vst [vmem:[#allocation5] sm:$0xff] %v267
    %270 = vst [vmem:[#allocation5 + $0x8] sm:$0xff] %v268
    // Predicated region
    $region18: #{tpu_custom_call.1} parent=1 // pred_check
      _
    $region19: #{tpu_custom_call.1} parent=1 // pred_check_branch
      %272 = sbr.rel (0) target = $region21
    $region20: #{tpu_custom_call.1} parent=1 // pred_region
      %s274 = ssub.s32 256, 256
      %275 = vsyncadd [#allocation4], %s274
      %s277 = sshll.u32 [#allocation5], 4
      %s278 = int_to_ptr.vmem [resolvable:$true] %s277
      %280 = dma.vmem_to_hbm [thread:$0]  %s278, 256, %s3, [#allocation4]
    $region21: #{tpu_custom_call.1} parent=1 // pred_fallthru
      _
    // Predicated region
    $region22: #{tpu_custom_call.1} parent=1 // pred_check
      _
    $region23: #{tpu_custom_call.1} parent=1 // pred_check_branch
      %282 = sbr.rel (0) target = $region25
    $region24: #{tpu_custom_call.1} parent=1 // pred_region
      %283 = dma.done [#allocation4], 256
    $region25: #{tpu_custom_call.1} parent=1 // pred_fallthru
      _
    %284 = vsyncpa [#allocation3], 1
    %285 = vsyncpa [#allocation4], 1

</llo_original>
